<compile_context>
chip_gen: v7x
topology: tpu7x:2x2x1
jax: 0.10.0
libtpu: 0.0.40
codegen_flags: <defaults>
</compile_context>

<pallas_src>
import functools

import jax
import jax.numpy as jnp
from jax.experimental import pallas as pl
from jax.experimental.pallas import tpu as pltpu


def _round_up(a: int, b: int) -> int:
    return (a + b - 1) // b * b


# --------------------------------------------------------------------------
# Hardware-derived configuration
# --------------------------------------------------------------------------
def _tpu_config():
    kind = ""
    try:
        kind = jax.devices()[0].device_kind.lower()
    except Exception:
        pass
    is_v7 = ("v7" in kind) or ("tpu7" in kind)
    is_v6 = "v6" in kind
    is_v5 = "v5" in kind

    vmem_cap = None
    try:
        vmem_cap = int(pltpu.get_tpu_info().vmem_capacity_bytes)
    except Exception:
        vmem_cap = None
    if not vmem_cap or vmem_cap <= 0:
        vmem_cap = (64 << 20) if is_v7 else (128 << 20)

    return dict(
        physical=vmem_cap,
        budget=int(vmem_cap * 3 // 4),          # ~96 MiB v5e/v6e, ~48 MiB v7x
        align=256 if (is_v6 or is_v7) else 128,  # 2x256x256 MXU vs 128x128
        relu_bf16=bool(is_v6 or is_v7),          # bf16 VALU only on v6e/v7x
        two_row_tiles=is_v7,                     # 2 TCs/chip on v7x
        tm_target=256 if is_v7 else 512,
    )


# --------------------------------------------------------------------------
# Kernels
# --------------------------------------------------------------------------
def _mlp_resident_kernel(x_ref, wfc_t_ref, wproj_t_ref, o_ref, *, relu_bf16):
    # x_ref: (tm, dim_pad); wfc_t_ref: (dim_pad, hdim_pad) resident;
    # wproj_t_ref: (hdim_pad, dim_pad) resident; o_ref: (tm, dim_pad).
    h = jnp.dot(x_ref[...], wfc_t_ref[...], preferred_element_type=jnp.float32)
    if relu_bf16:
        h = jnp.maximum(h.astype(wproj_t_ref.dtype), 0)
    else:
        h = jnp.maximum(h, 0.0).astype(wproj_t_ref.dtype)
    o_ref[...] = jnp.dot(h, wproj_t_ref[...],
                         preferred_element_type=jnp.float32).astype(o_ref.dtype)


def _mlp_streaming_kernel(x_ref, wfc_t_ref, wproj_t_ref, o_ref, acc_ref, *,
                          relu_bf16):
    # Hidden dimension streamed in (dim_pad, thd)/(thd, dim_pad) tiles;
    # acc_ref: (tm, dim_pad) f32 accumulator persisting over the k axis.
    k = pl.program_id(1)

    @pl.when(k == 0)
    def _():
        acc_ref[...] = jnp.zeros_like(acc_ref)

    h = jnp.dot(x_ref[...], wfc_t_ref[...], preferred_element_type=jnp.float32)
    if relu_bf16:
        h = jnp.maximum(h.astype(wproj_t_ref.dtype), 0)
    else:
        h = jnp.maximum(h, 0.0).astype(wproj_t_ref.dtype)
    acc_ref[...] += jnp.dot(h, wproj_t_ref[...],
                            preferred_element_type=jnp.float32)

    @pl.when(k == pl.num_programs(1) - 1)
    def _():
        o_ref[...] = acc_ref[...].astype(o_ref.dtype)


# --------------------------------------------------------------------------
# Weight preparation (hoisted out of the per-call path)
# --------------------------------------------------------------------------
def prepare_mlp_weights(w_fc, w_proj, *, compute_dtype=jnp.bfloat16, align=None):
    """One-time transform: transpose + pad + cast (do this at parameter load)."""
    if align is None:
        align = _tpu_config()["align"]
    hdim, dim = w_fc.shape
    assert w_proj.shape == (dim, hdim)
    dim_pad = _round_up(dim, align)
    hdim_pad = _round_up(hdim, align)
    wfc_t = jnp.pad(w_fc.T.astype(compute_dtype),
                    ((0, dim_pad - dim), (0, hdim_pad - hdim)))
    wproj_t = jnp.pad(w_proj.T.astype(compute_dtype),
                      ((0, hdim_pad - hdim), (0, dim_pad - dim)))
    return wfc_t, wproj_t, dim, hdim


def _pick_divisor_tile(total, align, cap):
    """Largest multiple of `align` that divides `total` and is <= cap."""
    cap = max(align, min(cap, total))
    best = align
    t = align
    while t <= cap:
        if total % t == 0:
            best = t
        t += align
    return best


# --------------------------------------------------------------------------
# Forward
# --------------------------------------------------------------------------
def mlp_forward_prepared(x, prepared, *, force_path=None):
    wfc_t, wproj_t, dim, hdim = prepared
    cfg = _tpu_config()
    dim_pad, hdim_pad = wfc_t.shape
    compute_dtype = wfc_t.dtype
    cbytes = jnp.dtype(compute_dtype).itemsize
    obytes = jnp.dtype(x.dtype).itemsize
    budget = cfg["budget"]
    align = cfg["align"]

    orig_shape = x.shape
    assert orig_shape[-1] == dim
    x2d = x.reshape(-1, dim)
    M = x2d.shape[0]

    # ---- row tile (multiple of 16: bf16 packs 2 rows per sublane) ----------
    M16 = _round_up(max(M, 1), 16)
    tm = max(16, _round_up(min(cfg["tm_target"], M16), 16))
    if cfg["two_row_tiles"] and M16 >= 32:
        tm = min(tm, max(16, _round_up(M16 // 2, 16)))  # keep both TCs busy

    # ---- conservative VMEM footprints (2x for every pipelined buffer) ------
    def resident_bytes(tm_):
        return (2 * tm_ * dim_pad * cbytes            # x tile
                + 2 * tm_ * dim_pad * obytes          # out tile
                + 2 * dim_pad * hdim_pad * cbytes     # w_fc^T   (resident)
                + 2 * hdim_pad * dim_pad * cbytes     # w_proj^T (resident)
                + tm_ * hdim_pad * (4 + cbytes))      # hidden f32 + bf16 temp

    def streaming_bytes(tm_, thd_):
        return (2 * tm_ * dim_pad * cbytes
                + 2 * tm_ * dim_pad * obytes
                + 2 * dim_pad * thd_ * cbytes
                + 2 * thd_ * dim_pad * cbytes
                + tm_ * dim_pad * 4                   # f32 accumulator scratch
                + tm_ * thd_ * (4 + cbytes))

    # ---- choose path A (weights VMEM-resident) if it fits the budget -------
    use_resident = False
    tm_res = tm
    while tm_res >= 16:
        if resident_bytes(tm_res) <= budget:
            use_resident = True
            break
        if tm_res <= 128:
            break
        tm_res = max(128, _round_up(tm_res // 2, 16))
    if force_path == "resident":
        use_resident = True
    elif force_path == "streaming":
        use_resident = False

    if use_resident:
        tm = tm_res
        M_pad = _round_up(max(M, 1), tm)
        grid = (M_pad // tm,)
        kernel = functools.partial(_mlp_resident_kernel,
                                   relu_bf16=cfg["relu_bf16"])
        in_specs = [
            pl.BlockSpec((tm, dim_pad), lambda i: (i, 0)),
            pl.BlockSpec((dim_pad, hdim_pad), lambda i: (0, 0)),   # resident
            pl.BlockSpec((hdim_pad, dim_pad), lambda i: (0, 0)),   # resident
        ]
        out_specs = pl.BlockSpec((tm, dim_pad), lambda i: (i, 0))
        scratch_shapes = []
        dim_sem = ("parallel",)
        footprint = resident_bytes(tm)
        weight_passes = 1
    else:
        # ---- path B: stream the hidden dimension (reduction axis) ----------
        thd = _pick_divisor_tile(hdim_pad, align, cap=1024)
        while streaming_bytes(tm, thd) > budget and (thd > align or tm > 16):
            if thd > align:
                thd = _pick_divisor_tile(hdim_pad, align, cap=thd // 2)
            else:
                tm = max(16, _round_up(tm // 2, 16))
        M_pad = _round_up(max(M, 1), tm)
        grid = (M_pad // tm, hdim_pad // thd)
        kernel = functools.partial(_mlp_streaming_kernel,
                                   relu_bf16=cfg["relu_bf16"])
        in_specs = [
            pl.BlockSpec((tm, dim_pad), lambda i, k: (i, 0)),
            pl.BlockSpec((dim_pad, thd), lambda i, k: (0, k)),
            pl.BlockSpec((thd, dim_pad), lambda i, k: (k, 0)),
        ]
        out_specs = pl.BlockSpec((tm, dim_pad), lambda i, k: (i, 0))
        scratch_shapes = [pltpu.VMEM((tm, dim_pad), jnp.float32)]
        dim_sem = ("parallel", "arbitrary")
        footprint = streaming_bytes(tm, thd)
        weight_passes = M_pad // tm

    vmem_limit = int(min(cfg["physical"], max(budget, footprint + (2 << 20))))

    cost = pl.CostEstimate(
        flops=4 * M_pad * dim_pad * hdim_pad,
        transcendentals=0,
        bytes_accessed=int(M_pad * dim_pad * (cbytes + obytes)
                           + weight_passes * 2 * dim_pad * hdim_pad * cbytes),
    )

    # ---- pad activations (cheap; weight prep is already hoisted) -----------
    x_p = jnp.pad(x2d.astype(compute_dtype),
                  ((0, M_pad - M), (0, dim_pad - dim)))

    out_p = pl.pallas_call(
        kernel,
        out_shape=jax.ShapeDtypeStruct((M_pad, dim_pad), x.dtype),
        grid_spec=pltpu.PrefetchScalarGridSpec(
            num_scalar_prefetch=0,
            grid=grid,
            in_specs=in_specs,
            out_specs=out_specs,
            scratch_shapes=scratch_shapes,
        ),
        compiler_params=pltpu.CompilerParams(
            dimension_semantics=dim_sem,
            vmem_limit_bytes=vmem_limit,
        ),
        cost_estimate=cost,
    )(x_p, wfc_t, wproj_t)

    return out_p[:M, :dim].reshape(orig_shape)


def make_mlp_forward(w_fc, w_proj, *, compute_dtype=jnp.bfloat16):
    """Prepare (transpose/pad/cast) the weights once; return an apply fn."""
    prepared = prepare_mlp_weights(w_fc, w_proj, compute_dtype=compute_dtype)
    return lambda x, **kw: mlp_forward_prepared(x, prepared, **kw)


def mlp_forward(x, w_fc, w_proj, *, compute_dtype=jnp.bfloat16):
    """Convenience wrapper (prepares weights per call; prefer make_mlp_forward)."""
    prepared = prepare_mlp_weights(w_fc, w_proj, compute_dtype=compute_dtype)
    return mlp_forward_prepared(x, prepared)


# --------------------------------------------------------------------------
# Reference + test
# --------------------------------------------------------------------------
def mlp_reference(x, w_fc, w_proj, compute_dtype=jnp.bfloat16):
    """Plain-JAX reference with identical numerics (bf16 matmul, f32 accum)."""
    dim = x.shape[-1]
    xc = x.reshape(-1, dim).astype(compute_dtype)
    h = jnp.dot(xc, w_fc.T.astype(compute_dtype),
                preferred_element_type=jnp.float32)
    h = jnp.maximum(h, 0.0)
    y = jnp.dot(h.astype(compute_dtype), w_proj.T.astype(compute_dtype),
                preferred_element_type=jnp.float32)
    return y.astype(x.dtype).reshape(x.shape)


if __name__ == "__main__":
    # Small shapes consistent with MLP: batch=2, seq=8, dim=32, mlp_ratio=4.
    batch, seq, dim, mlp_ratio = 2, 8, 32, 4
    hdim = mlp_ratio * dim

    key = jax.random.PRNGKey(0)
    kx, kw1, kw2 = jax.random.split(key, 3)
    x = jax.random.normal(kx, (batch, seq, dim), dtype=jnp.float32)

    # Parameters per MLP.__init__:
    #   c_fc.weight   : (hdim, dim)  random
    #   c_proj.weight : (dim, hdim)  zero-initialized
    w_fc = jax.random.normal(kw1, (hdim, dim), dtype=jnp.float32) * 0.02
    w_proj = jnp.zeros((dim, hdim), dtype=jnp.float32)

    # Hoisted weight prep (done once), then forward.
    fwd = make_mlp_forward(w_fc, w_proj)
    out = jax.block_until_ready(fwd(x))
    ref = mlp_reference(x, w_fc, w_proj)
    assert out.shape == x.shape and out.dtype == x.dtype
    assert jnp.allclose(out, ref, atol=2e-4, rtol=2e-4)

    # Non-zero projection weight so the second matmul path is exercised.
    w_proj2 = jax.random.normal(kw2, (dim, hdim), dtype=jnp.float32) * 0.02
    fwd2 = make_mlp_forward(w_fc, w_proj2)
    out2 = jax.block_until_ready(fwd2(x))
    ref2 = mlp_reference(x, w_fc, w_proj2)
    assert jnp.allclose(out2, ref2, atol=2e-4, rtol=2e-4)

    # Also exercise the streaming (hidden-reduction) fallback path.
    out3 = jax.block_until_ready(fwd2(x, force_path="streaming"))
    assert jnp.allclose(out3, ref2, atol=2e-4, rtol=2e-4)

    print("KERNEL_OK")
</pallas_src>

<mosaic_0001>
module attributes {stable_mosaic.version = 11 : i64} {
  func.func @_mlp_resident_kernel(%arg0: i32, %arg1: memref<16x128xbf16, #tpu.memory_space<vmem>>, %arg2: memref<128x128xbf16, #tpu.memory_space<vmem>>, %arg3: memref<128x128xbf16, #tpu.memory_space<vmem>>, %arg4: memref<16x128xf32, #tpu.memory_space<vmem>>) attributes {dimension_semantics = [#tpu.dimension_semantics<parallel>], iteration_bounds = array<i64: 1>, scalar_prefetch = 0 : i64, scratch_operands = 0 : i64, tpu.core_type = #tpu.core_type<tc>, window_params = [{transform_indices = @transform_0, window_bounds = array<i64: 16, 128>}, {pipeline_mode = #tpu.pipeline_mode<synchronous>, transform_indices = @transform_1, window_bounds = array<i64: 128, 128>}, {pipeline_mode = #tpu.pipeline_mode<synchronous>, transform_indices = @transform_2, window_bounds = array<i64: 128, 128>}, {transform_indices = @transform_3, window_bounds = array<i64: 16, 128>}]} {
    %c0 = arith.constant 0 : index
    %c0_0 = arith.constant 0 : index
    %0 = vector.load %arg1[%c0, %c0_0] : memref<16x128xbf16, #tpu.memory_space<vmem>>, vector<16x128xbf16>
    %c0_1 = arith.constant 0 : index
    %c0_2 = arith.constant 0 : index
    %1 = vector.load %arg2[%c0_1, %c0_2] : memref<128x128xbf16, #tpu.memory_space<vmem>>, vector<128x128xbf16>
    %cst = arith.constant dense<0.000000e+00> : vector<16x128xf32>
    %2 = tpu.matmul %0, %1, %cst {dimension_numbers = #tpu.dot_dimension_numbers<[1], [0], [0], [1], [0, 0, 1, 1], [], []>} : vector<16x128xbf16>, vector<128x128xbf16>, vector<16x128xf32> -> vector<16x128xf32>
    %cst_3 = arith.constant 0.000000e+00 : f32
    %3 = vector.broadcast %cst_3 : f32 to vector<16x128xf32>
    %4 = arith.maximumf %2, %3 : vector<16x128xf32>
    %5 = arith.truncf %4 : vector<16x128xf32> to vector<16x128xbf16>
    %c0_4 = arith.constant 0 : index
    %c0_5 = arith.constant 0 : index
    %6 = vector.load %arg3[%c0_4, %c0_5] : memref<128x128xbf16, #tpu.memory_space<vmem>>, vector<128x128xbf16>
    %cst_6 = arith.constant dense<0.000000e+00> : vector<16x128xf32>
    %7 = tpu.matmul %5, %6, %cst_6 {dimension_numbers = #tpu.dot_dimension_numbers<[1], [0], [0], [1], [0, 0, 1, 1], [], []>} : vector<16x128xbf16>, vector<128x128xbf16>, vector<16x128xf32> -> vector<16x128xf32>
    %c0_7 = arith.constant 0 : index
    %c0_8 = arith.constant 0 : index
    %8 = vector.load %arg4[%c0_7, %c0_8] : memref<16x128xf32, #tpu.memory_space<vmem>>, vector<16x128xf32>
    tpu.vector_store %arg4[%c0_7, %c0_8], %7 {strides = array<i32>} : memref<16x128xf32, #tpu.memory_space<vmem>>, vector<16x128xf32>,
    return
  }
  func.func @transform_0(%arg0: i32) -> (i32, i32) {
    %c0_i32 = arith.constant 0 : i32
    %c0_i32_0 = arith.constant 0 : i32
    return %arg0, %c0_i32 : i32, i32
  }
  func.func @transform_1(%arg0: i32) -> (i32, i32) {
    %c0_i32 = arith.constant 0 : i32
    %c0_i32_0 = arith.constant 0 : i32
    %c0_i32_1 = arith.constant 0 : i32
    return %c0_i32, %c0_i32_0 : i32, i32
  }
  func.func @transform_2(%arg0: i32) -> (i32, i32) {
    %c0_i32 = arith.constant 0 : i32
    %c0_i32_0 = arith.constant 0 : i32
    %c0_i32_1 = arith.constant 0 : i32
    return %c0_i32, %c0_i32_0 : i32, i32
  }
  func.func @transform_3(%arg0: i32) -> (i32, i32) {
    %c0_i32 = arith.constant 0 : i32
    %c0_i32_0 = arith.constant 0 : i32
    return %arg0, %c0_i32 : i32, i32
  }
}

</mosaic_0001>

<llo_original>
// kernel: tpu_custom_call.1
$region0: #{tpu_custom_call.1}
  #allocation0 [shape = 'u32[]', space=smem, size = 0x4, offset = 0x4, fixed_abs, tag = 'smem constant byte address 0x4 - core index']
  #allocation1 [shape = 'u32[144,128]{1,0:T(1,128)}', space=vmem, size = 0x12000, scoped, tag = 'internal scratch']
  %s0 = inlined_call_operand.hbm [shape: bf16[16,128], index: 0, kind: input, shape index: {}]
  %s1 = inlined_call_operand.hbm [shape: bf16[128,128], index: 1, kind: input, shape index: {}]
  %s2 = inlined_call_operand.hbm [shape: bf16[128,128], index: 2, kind: input, shape index: {}]
  %s3 = inlined_call_operand.hbm [shape: f32[16,128], index: 3, kind: output, shape index: {}]
  %s4 = sld [smem:[#allocation0]]
  $region34: #{tpu_custom_call.1} parent=0
    _
  %s6 = ssub.s32 1, %s4
  %s7 = scalar_select 0, %s6, %s4
  $region1: #{tpu_custom_call.1} parent=0
    #allocation2 [shape = 'u8[4096]{0}', space=vmem, size = 0x1000, scoped, tag = 'input window, operand 0, single buffered']
    #allocation3 [shape = 's32[1]{0}', space=sflag, size = 0x4, scoped, tag = 'scoped memory for tpu_custom_call.1']
    #allocation4 [shape = 's32[1]{0}', space=sflag, size = 0x4, scoped, tag = 'scoped memory for tpu_custom_call.1']
    #allocation5 [shape = 'u8[32768]{0}', space=vmem, size = 0x8000, scoped, tag = 'input window, operand 1, single buffered']
    #allocation6 [shape = 's32[1]{0}', space=sflag, size = 0x4, scoped, tag = 'scoped memory for tpu_custom_call.1']
    #allocation7 [shape = 'u8[32768]{0}', space=vmem, size = 0x8000, scoped, tag = 'input window, operand 2, single buffered']
    #allocation8 [shape = 'u8[8192]{0}', space=vmem, size = 0x2000, scoped, tag = 'output window, operand 0, single buffered']
    %8 = vsyncpa [#allocation3], 0
    %9 = vsyncpa [#allocation6], 0
    %10 = vsyncpa [#allocation4], 0
    // Predicated region
    $region2: #{tpu_custom_call.1} parent=1 // pred_check
      _
    $region3: #{tpu_custom_call.1} parent=1 // pred_check_branch
      %12 = sbr.rel (0) target = $region5
    $region4: #{tpu_custom_call.1} parent=1 // pred_region
      %s14 = ssub.s32 128, 128
      %15 = vsyncadd [#allocation3], %s14
      %s16 = sshll.u32 [#allocation2], 4
      %s17 = int_to_ptr.vmem [resolvable:$true] %s16
      %22 = dma.hbm_to_vmem [thread:$0]  %s0, 128, %s17, [#allocation3], 64, 64, 4
    $region5: #{tpu_custom_call.1} parent=1 // pred_fallthru
      _
    // Predicated region
    $region6: #{tpu_custom_call.1} parent=1 // pred_check
      _
    $region7: #{tpu_custom_call.1} parent=1 // pred_check_branch
      %24 = sbr.rel (0) target = $region9
    $region8: #{tpu_custom_call.1} parent=1 // pred_region
      %s26 = ssub.s32 1024, 1024
      %27 = vsyncadd [#allocation6], %s26
      %s28 = sshll.u32 [#allocation5], 4
      %s29 = int_to_ptr.vmem [resolvable:$true] %s28
      %34 = dma.hbm_to_vmem [thread:$0]  %s1, 1024, %s29, [#allocation6], 64, 64, 4
    $region9: #{tpu_custom_call.1} parent=1 // pred_fallthru
      _
    // Predicated region
    $region10: #{tpu_custom_call.1} parent=1 // pred_check
      _
    $region11: #{tpu_custom_call.1} parent=1 // pred_check_branch
      %36 = sbr.rel (0) target = $region13
    $region12: #{tpu_custom_call.1} parent=1 // pred_region
      %s38 = ssub.s32 1024, 1024
      %39 = vsyncadd [#allocation6], %s38
      %s40 = sshll.u32 [#allocation7], 4
      %s41 = int_to_ptr.vmem [resolvable:$true] %s40
      %46 = dma.hbm_to_vmem [thread:$0]  %s2, 1024, %s41, [#allocation6], 64, 64, 4
    $region13: #{tpu_custom_call.1} parent=1 // pred_fallthru
      _
    // Predicated region
    $region14: #{tpu_custom_call.1} parent=1 // pred_check
      _
    $region15: #{tpu_custom_call.1} parent=1 // pred_check_branch
      %48 = sbr.rel (0) target = $region17
    $region16: #{tpu_custom_call.1} parent=1 // pred_region
      %49 = dma.done [#allocation3], 128
    $region17: #{tpu_custom_call.1} parent=1 // pred_fallthru
      _
    // Predicated region
    $region18: #{tpu_custom_call.1} parent=1 // pred_check
      _
    $region19: #{tpu_custom_call.1} parent=1 // pred_check_branch
      %51 = sbr.rel (0) target = $region21
    $region20: #{tpu_custom_call.1} parent=1 // pred_region
      %52 = dma.done [#allocation6], 1024
    $region21: #{tpu_custom_call.1} parent=1 // pred_fallthru
      _
    // Predicated region
    $region22: #{tpu_custom_call.1} parent=1 // pred_check
      _
    $region23: #{tpu_custom_call.1} parent=1 // pred_check_branch
      %54 = sbr.rel (0) target = $region25
    $region24: #{tpu_custom_call.1} parent=1 // pred_region
      %55 = dma.done [#allocation6], 1024
    $region25: #{tpu_custom_call.1} parent=1 // pred_fallthru
      _
    %v57 = vld [vmem:[#allocation2] sm:$0xf]
    %v58 = vld [vmem:[#allocation2 + $0x4] sm:$0xf]
    %v59 = vld [vmem:[#allocation5] sm:$0xf]
    %v60 = vld [vmem:[#allocation5 + $0x4] sm:$0xf]
    %v61 = vld [vmem:[#allocation5 + $0x8] sm:$0xf]
    %v62 = vld [vmem:[#allocation5 + $0xc] sm:$0xf]
    %v63 = vld [vmem:[#allocation5 + $0x10] sm:$0xf]
    %v64 = vld [vmem:[#allocation5 + $0x14] sm:$0xf]
    %v65 = vld [vmem:[#allocation5 + $0x18] sm:$0xf]
    %v66 = vld [vmem:[#allocation5 + $0x1c] sm:$0xf]
    %v67 = vld [vmem:[#allocation5 + $0x20] sm:$0xf]
    %v68 = vld [vmem:[#allocation5 + $0x24] sm:$0xf]
    %v69 = vld [vmem:[#allocation5 + $0x28] sm:$0xf]
    %v70 = vld [vmem:[#allocation5 + $0x2c] sm:$0xf]
    %v71 = vld [vmem:[#allocation5 + $0x30] sm:$0xf]
    %v72 = vld [vmem:[#allocation5 + $0x34] sm:$0xf]
    %v73 = vld [vmem:[#allocation5 + $0x38] sm:$0xf]
    %v74 = vld [vmem:[#allocation5 + $0x3c] sm:$0xf]
    %v77 = vunpack.c.l.b16 %v57
    %v78 = vunpack.c.l.b16 %v58
    %v79 = vpack.c.b16 %v78, %v77
    %v97 = vunpack.c.l.b16 %v59
    %v98 = vunpack.c.l.b16 %v60
    %v99 = vunpack.c.l.b16 %v61
    %v100 = vunpack.c.l.b16 %v62
    %v101 = vunpack.c.l.b16 %v63
    %v102 = vunpack.c.l.b16 %v64
    %v103 = vunpack.c.l.b16 %v65
    %v104 = vunpack.c.l.b16 %v66
    %v105 = vunpack.c.l.b16 %v67
    %v106 = vunpack.c.l.b16 %v68
    %v107 = vunpack.c.l.b16 %v69
    %v108 = vunpack.c.l.b16 %v70
    %v109 = vunpack.c.l.b16 %v71
    %v110 = vunpack.c.l.b16 %v72
    %v111 = vunpack.c.l.b16 %v73
    %v112 = vunpack.c.l.b16 %v74
    %v113 = vpack.c.b16 %v98, %v97
    %v114 = vpack.c.b16 %v100, %v99
    %v115 = vpack.c.b16 %v102, %v101
    %v116 = vpack.c.b16 %v104, %v103
    %v117 = vpack.c.b16 %v106, %v105
    %v118 = vpack.c.b16 %v108, %v107
    %v119 = vpack.c.b16 %v110, %v109
    %v120 = vpack.c.b16 %v112, %v111
    %129 = vmatprep.subr.bf16.mxu0 0
    %130 = vmatpush1.bf16.msra.mxu0 %v113
    %131 = vmatprep.subr.bf16.mxu0 0
    %132 = vmatpush1.bf16.msra.mxu0 %v114
    %133 = vmatprep.subr.bf16.mxu0 0
    %134 = vmatpush1.bf16.msra.mxu0 %v115
    %135 = vmatprep.subr.bf16.mxu0 0
    %136 = vmatpush1.bf16.msra.mxu0 %v116
    %137 = vmatprep.subr.bf16.mxu0 0
    %138 = vmatpush1.bf16.msra.mxu0 %v117
    %139 = vmatprep.subr.bf16.mxu0 0
    %140 = vmatpush1.bf16.msra.mxu0 %v118
    %141 = vmatprep.subr.bf16.mxu0 0
    %142 = vmatpush1.bf16.msra.mxu0 %v119
    %143 = vmatprep.subr.bf16.mxu0 0
    %144 = vmatpush1.bf16.msra.mxu0 %v120
    %145 = vmatprep.subr.bf16.mxu0 0
    %146 = vmatpush1.bf16.msra.mxu0 0
    %147 = vmatprep.subr.bf16.mxu0 0
    %148 = vmatpush1.bf16.msra.mxu0 0
    %149 = vmatprep.subr.bf16.mxu0 0
    %150 = vmatpush1.bf16.msra.mxu0 0
    %151 = vmatprep.subr.bf16.mxu0 0
    %152 = vmatpush1.bf16.msra.mxu0 0
    %153 = vmatprep.subr.bf16.mxu0 0
    %154 = vmatpush1.bf16.msra.mxu0 0
    %155 = vmatprep.subr.bf16.mxu0 0
    %156 = vmatpush1.bf16.msra.mxu0 0
    %157 = vmatprep.subr.bf16.mxu0 0
    %158 = vmatpush1.bf16.msra.mxu0 0
    %159 = vmatprep.subr.bf16.mxu0 0
    %160 = vmatpush1.bf16.msra.mxu0 0
    %161 = vmatprep.mubr.bf16.mxu0 0
    %162 = vmatmul.mubr.bf16.gmra.mrb[0].mxu0 %v79
    %v163 = vpop.f32.mrb[0].mxu0
    %v164 = vadd.f32 0.0, %v163
    %v165 = vpop.f32.mrb[0].mxu0
    %v166 = vpop.f32.mrb[0].mxu0
    %v167 = vadd.f32 0.0, %v166
    %v168 = vpop.f32.mrb[0].mxu0
    %169 = vdwg.mxu0
    %v170 = vmax.f32 %v164, 0.0
    %v171 = vmax.f32 %v167, 0.0
    %v172 = vpack.c.bf16 %v171, %v170
    %v173 = vld [vmem:[#allocation7] sm:$0xf]
    %v174 = vld [vmem:[#allocation7 + $0x4] sm:$0xf]
    %v175 = vld [vmem:[#allocation7 + $0x8] sm:$0xf]
    %v176 = vld [vmem:[#allocation7 + $0xc] sm:$0xf]
    %v177 = vld [vmem:[#allocation7 + $0x10] sm:$0xf]
    %v178 = vld [vmem:[#allocation7 + $0x14] sm:$0xf]
    %v179 = vld [vmem:[#allocation7 + $0x18] sm:$0xf]
    %v180 = vld [vmem:[#allocation7 + $0x1c] sm:$0xf]
    %v181 = vld [vmem:[#allocation7 + $0x20] sm:$0xf]
    %v182 = vld [vmem:[#allocation7 + $0x24] sm:$0xf]
    %v183 = vld [vmem:[#allocation7 + $0x28] sm:$0xf]
    %v184 = vld [vmem:[#allocation7 + $0x2c] sm:$0xf]
    %v185 = vld [vmem:[#allocation7 + $0x30] sm:$0xf]
    %v186 = vld [vmem:[#allocation7 + $0x34] sm:$0xf]
    %v187 = vld [vmem:[#allocation7 + $0x38] sm:$0xf]
    %v188 = vld [vmem:[#allocation7 + $0x3c] sm:$0xf]
    %v205 = vunpack.c.l.b16 %v173
    %v206 = vunpack.c.l.b16 %v174
    %v207 = vunpack.c.l.b16 %v175
    %v208 = vunpack.c.l.b16 %v176
    %v209 = vunpack.c.l.b16 %v177
    %v210 = vunpack.c.l.b16 %v178
    %v211 = vunpack.c.l.b16 %v179
    %v212 = vunpack.c.l.b16 %v180
    %v213 = vunpack.c.l.b16 %v181
    %v214 = vunpack.c.l.b16 %v182
    %v215 = vunpack.c.l.b16 %v183
    %v216 = vunpack.c.l.b16 %v184
    %v217 = vunpack.c.l.b16 %v185
    %v218 = vunpack.c.l.b16 %v186
    %v219 = vunpack.c.l.b16 %v187
    %v220 = vunpack.c.l.b16 %v188
    %v221 = vpack.c.b16 %v206, %v205
    %v222 = vpack.c.b16 %v208, %v207
    %v223 = vpack.c.b16 %v210, %v209
    %v224 = vpack.c.b16 %v212, %v211
    %v225 = vpack.c.b16 %v214, %v213
    %v226 = vpack.c.b16 %v216, %v215
    %v227 = vpack.c.b16 %v218, %v217
    %v228 = vpack.c.b16 %v220, %v219
    %237 = vmatprep.subr.bf16.mxu0 0
    %238 = vmatpush1.bf16.msra.mxu0 %v221
    %239 = vmatprep.subr.bf16.mxu0 0
    %240 = vmatpush1.bf16.msra.mxu0 %v222
    %241 = vmatprep.subr.bf16.mxu0 0
    %242 = vmatpush1.bf16.msra.mxu0 %v223
    %243 = vmatprep.subr.bf16.mxu0 0
    %244 = vmatpush1.bf16.msra.mxu0 %v224
    %245 = vmatprep.subr.bf16.mxu0 0
    %246 = vmatpush1.bf16.msra.mxu0 %v225
    %247 = vmatprep.subr.bf16.mxu0 0
    %248 = vmatpush1.bf16.msra.mxu0 %v226
    %249 = vmatprep.subr.bf16.mxu0 0
    %250 = vmatpush1.bf16.msra.mxu0 %v227
    %251 = vmatprep.subr.bf16.mxu0 0
    %252 = vmatpush1.bf16.msra.mxu0 %v228
    %253 = vmatprep.subr.bf16.mxu0 0
    %254 = vmatpush1.bf16.msra.mxu0 0
    %255 = vmatprep.subr.bf16.mxu0 0
    %256 = vmatpush1.bf16.msra.mxu0 0
    %257 = vmatprep.subr.bf16.mxu0 0
    %258 = vmatpush1.bf16.msra.mxu0 0
    %259 = vmatprep.subr.bf16.mxu0 0
    %260 = vmatpush1.bf16.msra.mxu0 0
    %261 = vmatprep.subr.bf16.mxu0 0
    %262 = vmatpush1.bf16.msra.mxu0 0
    %263 = vmatprep.subr.bf16.mxu0 0
    %264 = vmatpush1.bf16.msra.mxu0 0
    %265 = vmatprep.subr.bf16.mxu0 0
    %266 = vmatpush1.bf16.msra.mxu0 0
    %267 = vmatprep.subr.bf16.mxu0 0
    %268 = vmatpush1.bf16.msra.mxu0 0
    %269 = vmatprep.mubr.bf16.mxu0 0
    %270 = vmatmul.mubr.bf16.gmra.mrb[0].mxu0 %v172
    %v271 = vpop.f32.mrb[0].mxu0
    %v272 = vadd.f32 0.0, %v271
    %v273 = vpop.f32.mrb[0].mxu0
    %v274 = vpop.f32.mrb[0].mxu0
    %v275 = vadd.f32 0.0, %v274
    %v276 = vpop.f32.mrb[0].mxu0
    %277 = vdwg.mxu0
    %278 = vst [vmem:[#allocation8] sm:$0xff] %v272
    %279 = vst [vmem:[#allocation8 + $0x8] sm:$0xff] %v275
    // Predicated region
    $region26: #{tpu_custom_call.1} parent=1 // pred_check
      _
    $region27: #{tpu_custom_call.1} parent=1 // pred_check_branch
      %281 = sbr.rel (0) target = $region29
    $region28: #{tpu_custom_call.1} parent=1 // pred_region
      %s283 = ssub.s32 256, 256
      %284 = vsyncadd [#allocation4], %s283
      %s285 = sshll.u32 [#allocation8], 4
      %s286 = int_to_ptr.vmem [resolvable:$true] %s285
      %291 = dma.vmem_to_hbm [thread:$0]  %s286, 256, %s3, [#allocation4], 128, 128, 8
    $region29: #{tpu_custom_call.1} parent=1 // pred_fallthru
      _
    // Predicated region
    $region30: #{tpu_custom_call.1} parent=1 // pred_check
      _
    $region31: #{tpu_custom_call.1} parent=1 // pred_check_branch
      %293 = sbr.rel (0) target = $region33
    $region32: #{tpu_custom_call.1} parent=1 // pred_region
      %294 = dma.done [#allocation4], 256
    $region33: #{tpu_custom_call.1} parent=1 // pred_fallthru
      _
    %295 = vsyncpa [#allocation3], 1
    %296 = vsyncpa [#allocation6], 1
    %297 = vsyncpa [#allocation4], 1

</llo_original>
